<compile_context>
chip_gen: v6e
topology: v6e:2x2x1
jax: 0.10.0
libtpu: 0.0.40
codegen_flags: <defaults>
</compile_context>

<pallas_src>
import functools

import jax
import jax.numpy as jnp
from jax import lax
from jax.experimental import pallas as pl
from jax.experimental.pallas import tpu as pltpu


# Contract the *last* axis of both operands:  (M, K) x (N, K) -> (M, N).
# Used only by the one-shot forward so the PyTorch (out, in) weight layouts
# can be consumed without any wrapper-side transpose.
_CONTRACT_LAST = (((1,), (1,)), ((), ()))


# ----------------------------------------------------------------------------
# Single-step forward (one-off use only; loops should use the fused kernel).
# ----------------------------------------------------------------------------
def _rfm_forward_kernel(x_ref, w_in_ref, b_in_ref, w_out_ref, o_ref):
    # x_ref: (1, D); w_in_ref: (D_r, D); b_in_ref: (1, D_r); w_out_ref: (D, D_r)
    x = x_ref[...]
    h = jnp.tanh(
        lax.dot_general(x, w_in_ref[...], _CONTRACT_LAST,
                        preferred_element_type=jnp.float32)
        + b_in_ref[...]
    )
    y = lax.dot_general(h, w_out_ref[...], _CONTRACT_LAST,
                        preferred_element_type=jnp.float32)
    o_ref[...] = y.astype(o_ref.dtype)


def rfm_forward(x, w_in, b_in, w_out):
    """Single-step RFM.forward: y = W_out @ tanh(W_in @ x + b_in).

    Prefer rfm_multistep_forecast for anything called in a loop.
    """
    D_r, D = w_in.shape
    assert w_out.shape == (D, D_r)
    assert x.shape == (D,)
    assert b_in.shape == (D_r,)

    x2 = x.reshape(1, D)
    b2 = b_in.reshape(1, D_r)

    vmem = pl.BlockSpec(memory_space=pltpu.MemorySpace.VMEM)
    out = pl.pallas_call(
        _rfm_forward_kernel,
        out_shape=jax.ShapeDtypeStruct((1, D), x.dtype),
        in_specs=[vmem, vmem, vmem, vmem],
        out_specs=vmem,
    )(x2, w_in, b2, w_out)
    return out.reshape(D)


# ----------------------------------------------------------------------------
# Fused multistep forecast.
# ----------------------------------------------------------------------------
def _rfm_multistep_kernel(u0_ref, w_in_t_ref, b_in_ref, w_out_t_ref,
                          traj_ref, state_ref, *, n_steps, n_chunks):
    # Grid axis 0 = time-chunk index ("arbitrary": sequential recurrence).
    # traj_ref is the (T, D) output block for this chunk; rows are time steps.
    c = pl.program_id(0)
    T = traj_ref.shape[0]

    @pl.when(c == 0)
    def _():
        state_ref[...] = u0_ref[...].astype(state_ref.dtype)

    # Weights stay VMEM-resident (constant index_map); pre-transposed once in
    # the wrapper so both matmuls are canonical (no per-step relayout).
    w_in_t = w_in_t_ref[...]    # (D, D_r)
    b_in = b_in_ref[...]        # (1, D_r)
    w_out_t = w_out_t_ref[...]  # (D_r, D)

    def advance(s):
        h = jnp.tanh(jnp.dot(s, w_in_t, preferred_element_type=jnp.float32)
                     + b_in)
        return jnp.dot(h, w_out_t, preferred_element_type=jnp.float32)

    s0 = state_ref[...]
    traj_ref[0:1, :] = s0.astype(traj_ref.dtype)

    # Number of rows to fill in this chunk (static when there is one chunk).
    if n_chunks == 1:
        t_hi = n_steps
    else:
        t_hi = jnp.minimum(T, n_steps - c * T)

    def body(i, s):
        s = advance(s)
        traj_ref[pl.ds(i, 1), :] = s.astype(traj_ref.dtype)
        return s

    s_last = lax.fori_loop(1, t_hi, body, s0)

    # Carry the state into the next chunk. Guarding on c + 1 < n_chunks also
    # skips the dead final update of the whole trajectory.
    @pl.when(c + 1 < n_chunks)
    def _():
        state_ref[...] = advance(s_last)


def rfm_multistep_forecast(u, n_steps, w_in, b_in, w_out, *, max_chunk=128):
    """Fused multistep forecast (module's multistep_forecast).

    Returns a (D, n_steps) trajectory; column 0 is the initial state, column t
    is the state after t forward updates (exactly n_steps - 1 updates total).
    Weights are DMA'd to VMEM once per chunk of up to `max_chunk` steps.
    """
    D_r, D = w_in.shape
    assert w_out.shape == (D, D_r)
    assert u.shape == (D,)
    assert b_in.shape == (D_r,)
    assert n_steps >= 1

    # One-time wrapper-side layout work, amortized over all steps.
    w_in_t = w_in.T            # (D, D_r)
    w_out_t = w_out.T          # (D_r, D)
    u2 = u.reshape(1, D)
    b2 = b_in.reshape(1, D_r)

    T = min(n_steps, max_chunk)
    n_chunks = pl.cdiv(n_steps, T)
    padded = n_chunks * T

    kernel = functools.partial(_rfm_multistep_kernel,
                               n_steps=n_steps, n_chunks=n_chunks)

    traj = pl.pallas_call(
        kernel,
        out_shape=jax.ShapeDtypeStruct((padded, D), u.dtype),
        grid=(n_chunks,),
        in_specs=[
            pl.BlockSpec((1, D), lambda c: (0, 0)),       # initial state
            pl.BlockSpec((D, D_r), lambda c: (0, 0)),     # W_in^T, VMEM-resident
            pl.BlockSpec((1, D_r), lambda c: (0, 0)),     # b_in,   VMEM-resident
            pl.BlockSpec((D_r, D), lambda c: (0, 0)),     # W_out^T, VMEM-resident
        ],
        out_specs=pl.BlockSpec((T, D), lambda c: (c, 0)),
        scratch_shapes=[pltpu.VMEM((1, D), jnp.float32)],  # cross-chunk state
        compiler_params=pltpu.CompilerParams(
            dimension_semantics=("arbitrary",)),
    )(u2, w_in_t, b2, w_out_t)

    if padded != n_steps:
        traj = traj[:n_steps]
    return traj.T  # (D, n_steps); tiny final layout op


if __name__ == "__main__":
    # Small shapes consistent with the module: D = input dim, D_r = #features.
    D, D_r, B = 32, 64, 1   # B is unused by the module's forward
    n_steps = 8

    key = jax.random.PRNGKey(0)
    k_x, k_win, k_bin, k_wout = jax.random.split(key, 4)

    x = jax.random.normal(k_x, (D,), dtype=jnp.float32)
    w_in = jax.random.normal(k_win, (D_r, D), dtype=jnp.float32) * 0.1
    b_in = jax.random.normal(k_bin, (D_r,), dtype=jnp.float32) * 0.1
    w_out = jax.random.normal(k_wout, (D, D_r), dtype=jnp.float32) * 0.1

    # --- single-step forward ---
    y = rfm_forward(x, w_in, b_in, w_out)
    jax.block_until_ready(y)
    y_ref = jnp.tanh(w_in @ x + b_in) @ w_out.T
    assert y.shape == (D,)
    assert jnp.allclose(y, y_ref, atol=1e-5, rtol=1e-5)

    def multistep_reference(u0, steps):
        u = u0
        cols = [u]
        for _ in range(steps - 1):
            u = jnp.tanh(w_in @ u + b_in) @ w_out.T
            cols.append(u)
        return jnp.stack(cols, axis=1)  # (D, steps)

    # --- fused multistep forecast (single chunk path) ---
    traj = rfm_multistep_forecast(x, n_steps, w_in, b_in, w_out)
    jax.block_until_ready(traj)
    traj_ref = multistep_reference(x, n_steps)
    assert traj.shape == (D, n_steps)
    assert jnp.allclose(traj, traj_ref, atol=1e-4, rtol=1e-4)

    # --- multi-chunk path (exercises grid > 1, partial last chunk, padding) ---
    n_steps2 = 37
    traj2 = rfm_multistep_forecast(x, n_steps2, w_in, b_in, w_out, max_chunk=16)
    jax.block_until_ready(traj2)
    traj2_ref = multistep_reference(x, n_steps2)
    assert traj2.shape == (D, n_steps2)
    assert jnp.allclose(traj2, traj2_ref, atol=1e-4, rtol=1e-4)

    print("KERNEL_OK")
</pallas_src>

<mosaic_0001>
module attributes {stable_mosaic.version = 11 : i64} {
  func.func @_rfm_forward_kernel(%arg0: memref<1x32xf32, #tpu.memory_space<vmem>>, %arg1: memref<64x32xf32, #tpu.memory_space<vmem>>, %arg2: memref<1x64xf32, #tpu.memory_space<vmem>>, %arg3: memref<32x64xf32, #tpu.memory_space<vmem>>, %arg4: memref<1x32xf32, #tpu.memory_space<vmem>>) attributes {dimension_semantics = [], scalar_prefetch = 0 : i64, scratch_operands = 0 : i64, tpu.core_type = #tpu.core_type<tc>} {
    %c0 = arith.constant 0 : index
    %c0_0 = arith.constant 0 : index
    %0 = vector.load %arg0[%c0, %c0_0] : memref<1x32xf32, #tpu.memory_space<vmem>>, vector<1x32xf32>
    %c0_1 = arith.constant 0 : index
    %c0_2 = arith.constant 0 : index
    %1 = vector.load %arg1[%c0_1, %c0_2] : memref<64x32xf32, #tpu.memory_space<vmem>>, vector<64x32xf32>
    %cst = arith.constant dense<0.000000e+00> : vector<1x64xf32>
    %2 = tpu.matmul %0, %1, %cst {dimension_numbers = #tpu.dot_dimension_numbers<[1], [1], [0], [0], [0, 0, 1, 0], [], []>} : vector<1x32xf32>, vector<64x32xf32>, vector<1x64xf32> -> vector<1x64xf32>
    %c0_3 = arith.constant 0 : index
    %c0_4 = arith.constant 0 : index
    %3 = vector.load %arg2[%c0_3, %c0_4] : memref<1x64xf32, #tpu.memory_space<vmem>>, vector<1x64xf32>
    %4 = arith.addf %2, %3 : vector<1x64xf32>
    %5 = math.tanh %4 : vector<1x64xf32>
    %c0_5 = arith.constant 0 : index
    %c0_6 = arith.constant 0 : index
    %6 = vector.load %arg3[%c0_5, %c0_6] : memref<32x64xf32, #tpu.memory_space<vmem>>, vector<32x64xf32>
    %cst_7 = arith.constant dense<0.000000e+00> : vector<1x32xf32>
    %7 = tpu.matmul %5, %6, %cst_7 {dimension_numbers = #tpu.dot_dimension_numbers<[1], [1], [0], [0], [0, 0, 1, 0], [], []>} : vector<1x64xf32>, vector<32x64xf32>, vector<1x32xf32> -> vector<1x32xf32>
    %c0_8 = arith.constant 0 : index
    %c0_9 = arith.constant 0 : index
    %8 = vector.load %arg4[%c0_8, %c0_9] : memref<1x32xf32, #tpu.memory_space<vmem>>, vector<1x32xf32>
    tpu.vector_store %arg4[%c0_8, %c0_9], %7 {strides = array<i32>} : memref<1x32xf32, #tpu.memory_space<vmem>>, vector<1x32xf32>,
    return
  }
}

</mosaic_0001>

<llo_original>
// kernel: tpu_custom_call.1
$region0: #{tpu_custom_call.1}
  #allocation0 [shape = 'u32[]', space=smem, size = 0x4, offset = 0x4, fixed_abs, tag = 'smem constant byte address 0x4 - core index']
  #allocation1 [shape = 'u32[144,128]{1,0:T(1,128)}', space=vmem, size = 0x12000, scoped, tag = 'internal scratch']
  %s0 = inlined_call_operand.vmem [shape: f32[1,32], index: 0, kind: input, shape index: {}]
  %s1 = inlined_call_operand.vmem [shape: f32[64,32], index: 1, kind: input, shape index: {}]
  %s2 = inlined_call_operand.vmem [shape: f32[1,64], index: 2, kind: input, shape index: {}]
  %s3 = inlined_call_operand.vmem [shape: f32[32,64], index: 3, kind: input, shape index: {}]
  %s4 = inlined_call_operand.hbm [shape: f32[1,32], index: 4, kind: output, shape index: {}]
  %s5 = sld [smem:[#allocation0]]
  $region26: #{tpu_custom_call.1} parent=0
    _
  %s7 = ssub.s32 1, %s5
  %s8 = scalar_select 0, %s7, %s5
  $region1: #{tpu_custom_call.1} parent=0
    #allocation2 [shape = 'u8[512]{0}', space=vmem, size = 0x400, scoped, tag = 'output window, operand 0, single buffered']
    #allocation3 [shape = 's32[1]{0}', space=sflag, size = 0x4, scoped, tag = 'scoped memory for tpu_custom_call.1']
    %9 = vsyncpa [#allocation3], 0
    // Predicated region
    $region2: #{tpu_custom_call.1} parent=1 // pred_check
      _
    $region3: #{tpu_custom_call.1} parent=1 // pred_check_branch
      %11 = sbr.rel (0) target = $region5
    $region4: #{tpu_custom_call.1} parent=1 // pred_region
      _
    $region5: #{tpu_custom_call.1} parent=1 // pred_fallthru
      _
    // Predicated region
    $region6: #{tpu_custom_call.1} parent=1 // pred_check
      _
    $region7: #{tpu_custom_call.1} parent=1 // pred_check_branch
      %13 = sbr.rel (0) target = $region9
    $region8: #{tpu_custom_call.1} parent=1 // pred_region
      _
    $region9: #{tpu_custom_call.1} parent=1 // pred_fallthru
      _
    // Predicated region
    $region10: #{tpu_custom_call.1} parent=1 // pred_check
      _
    $region11: #{tpu_custom_call.1} parent=1 // pred_check_branch
      %15 = sbr.rel (0) target = $region13
    $region12: #{tpu_custom_call.1} parent=1 // pred_region
      _
    $region13: #{tpu_custom_call.1} parent=1 // pred_fallthru
      _
    // Predicated region
    $region14: #{tpu_custom_call.1} parent=1 // pred_check
      _
    $region15: #{tpu_custom_call.1} parent=1 // pred_check_branch
      %17 = sbr.rel (0) target = $region17
    $region16: #{tpu_custom_call.1} parent=1 // pred_region
      _
    $region17: #{tpu_custom_call.1} parent=1 // pred_fallthru
      _
    %v18 = vld [vmem:[%s0] sm:$0x1]
    %v19 = vld [vmem:[%s1] sm:$0xff]
    %v20 = vld [vmem:[%s1 + $0x8] sm:$0xff]
    %v21 = vld [vmem:[%s1 + $0x10] sm:$0xff]
    %v22 = vld [vmem:[%s1 + $0x18] sm:$0xff]
    %v23 = vld [vmem:[%s1 + $0x20] sm:$0xff]
    %v24 = vld [vmem:[%s1 + $0x28] sm:$0xff]
    %v25 = vld [vmem:[%s1 + $0x30] sm:$0xff]
    %v26 = vld [vmem:[%s1 + $0x38] sm:$0xff]
    %v27 = vld [vmem:[%s2] sm:$0x1]
    %vm28 = vcmask 261120
    %v30 = vsel %vm28, %v18, 0
    %v33 = vsel %vm28, %v19, 0
    %v36 = vsel %vm28, %v20, 0
    %v39 = vsel %vm28, %v21, 0
    %v42 = vsel %vm28, %v22, 0
    %v45 = vsel %vm28, %v23, 0
    %v48 = vsel %vm28, %v24, 0
    %v51 = vsel %vm28, %v25, 0
    %v54 = vsel %vm28, %v26, 0
    %56 = vmatprep.subr.mxu0 0.0
    %57 = vmatpush1.xpose.msra.mxu0 0.0
    %58 = vmatprep.subr.mxu0 0.0
    %59 = vmatpush1.xpose.msra.mxu0 0.0
    %60 = vmatprep.subr.mxu0 0.0
    %61 = vmatpush1.xpose.msra.mxu0 0.0
    %62 = vmatprep.subr.mxu0 0.0
    %63 = vmatpush1.xpose.msra.mxu0 0.0
    %64 = vmatprep.subr.mxu0 0.0
    %65 = vmatpush1.xpose.msra.mxu0 0.0
    %66 = vmatprep.subr.mxu0 0.0
    %67 = vmatpush1.xpose.msra.mxu0 0.0
    %68 = vmatprep.subr.mxu0 0.0
    %69 = vmatpush1.xpose.msra.mxu0 0.0
    %70 = vmatprep.subr.mxu0 0.0
    %71 = vmatpush1.xpose.msra.mxu0 0.0
    %72 = vmatprep.subr.mxu0 0.0
    %73 = vmatpush1.xpose.msra.mxu0 %v54
    %74 = vmatprep.subr.mxu0 0.0
    %75 = vmatpush1.xpose.msra.mxu0 %v51
    %76 = vmatprep.subr.mxu0 0.0
    %77 = vmatpush1.xpose.msra.mxu0 %v48
    %78 = vmatprep.subr.mxu0 0.0
    %79 = vmatpush1.xpose.msra.mxu0 %v45
    %80 = vmatprep.subr.mxu0 0.0
    %81 = vmatpush1.xpose.msra.mxu0 %v42
    %82 = vmatprep.subr.mxu0 0.0
    %83 = vmatpush1.xpose.msra.mxu0 %v39
    %84 = vmatprep.subr.mxu0 0.0
    %85 = vmatpush1.xpose.msra.mxu0 %v36
    %86 = vmatprep.subr.mxu0 0.0
    %87 = vmatpush1.xpose.msra.mxu0 %v33
    %88 = vmatprep.subr.mxu0 0.0
    %89 = vmatpush2.xpose.msra.mxu0 0.0
    %90 = vmatprep.subr.mxu0 0.0
    %91 = vmatpush2.xpose.msra.mxu0 0.0
    %92 = vmatprep.subr.mxu0 0.0
    %93 = vmatpush2.xpose.msra.mxu0 0.0
    %94 = vmatprep.subr.mxu0 0.0
    %95 = vmatpush2.xpose.msra.mxu0 0.0
    %96 = vmatprep.subr.mxu0 0.0
    %97 = vmatpush2.xpose.msra.mxu0 0.0
    %98 = vmatprep.subr.mxu0 0.0
    %99 = vmatpush2.xpose.msra.mxu0 0.0
    %100 = vmatprep.subr.mxu0 0.0
    %101 = vmatpush2.xpose.msra.mxu0 0.0
    %102 = vmatprep.subr.mxu0 0.0
    %103 = vmatpush2.xpose.msra.mxu0 0.0
    %104 = vmatprep.subr.mxu0 0.0
    %105 = vmatpush2.xpose.msra.mxu0 0.0
    %106 = vmatprep.subr.mxu0 0.0
    %107 = vmatpush2.xpose.msra.mxu0 0.0
    %108 = vmatprep.subr.mxu0 0.0
    %109 = vmatpush2.xpose.msra.mxu0 0.0
    %110 = vmatprep.subr.mxu0 0.0
    %111 = vmatpush2.xpose.msra.mxu0 0.0
    %112 = vmatprep.subr.mxu0 0.0
    %113 = vmatpush2.xpose.msra.mxu0 0.0
    %114 = vmatprep.subr.mxu0 0.0
    %115 = vmatpush2.xpose.msra.mxu0 0.0
    %116 = vmatprep.subr.mxu0 0.0
    %117 = vmatpush2.xpose.msra.mxu0 0.0
    %118 = vmatprep.subr.mxu0 0.0
    %119 = vmatpush2.xpose.msra.mxu0 0.0
    %120 = vmatprep.mubr.f32.mxu0 0.0
    %121 = vmatmul.mubr.f32.gmra.mxu0 %v30
    %v122 = vpop.f32.mrf.mxu0
    %v123 = vadd.f32 %v27, %v122
    %v124 = vpop.f32.mrf.mxu0
    %125 = vdwg.mxu0
    %v126 = vtanh.pop %v123
    %v127 = vld [vmem:[%s3] sm:$0xff]
    %v128 = vld [vmem:[%s3 + $0x8] sm:$0xff]
    %v129 = vld [vmem:[%s3 + $0x10] sm:$0xff]
    %v130 = vld [vmem:[%s3 + $0x18] sm:$0xff]
    %vm131 = vcmask 523264
    %v133 = vsel %vm131, %v126, 0
    %v136 = vsel %vm131, %v127, 0
    %v139 = vsel %vm131, %v128, 0
    %v142 = vsel %vm131, %v129, 0
    %v145 = vsel %vm131, %v130, 0
    %147 = vmatprep.subr.mxu0 0.0
    %148 = vmatpush1.xpose.msra.mxu0 0.0
    %149 = vmatprep.subr.mxu0 0.0
    %150 = vmatpush1.xpose.msra.mxu0 0.0
    %151 = vmatprep.subr.mxu0 0.0
    %152 = vmatpush1.xpose.msra.mxu0 0.0
    %153 = vmatprep.subr.mxu0 0.0
    %154 = vmatpush1.xpose.msra.mxu0 0.0
    %155 = vmatprep.subr.mxu0 0.0
    %156 = vmatpush1.xpose.msra.mxu0 0.0
    %157 = vmatprep.subr.mxu0 0.0
    %158 = vmatpush1.xpose.msra.mxu0 0.0
    %159 = vmatprep.subr.mxu0 0.0
    %160 = vmatpush1.xpose.msra.mxu0 0.0
    %161 = vmatprep.subr.mxu0 0.0
    %162 = vmatpush1.xpose.msra.mxu0 0.0
    %163 = vmatprep.subr.mxu0 0.0
    %164 = vmatpush1.xpose.msra.mxu0 0.0
    %165 = vmatprep.subr.mxu0 0.0
    %166 = vmatpush1.xpose.msra.mxu0 0.0
    %167 = vmatprep.subr.mxu0 0.0
    %168 = vmatpush1.xpose.msra.mxu0 0.0
    %169 = vmatprep.subr.mxu0 0.0
    %170 = vmatpush1.xpose.msra.mxu0 0.0
    %171 = vmatprep.subr.mxu0 0.0
    %172 = vmatpush1.xpose.msra.mxu0 %v145
    %173 = vmatprep.subr.mxu0 0.0
    %174 = vmatpush1.xpose.msra.mxu0 %v142
    %175 = vmatprep.subr.mxu0 0.0
    %176 = vmatpush1.xpose.msra.mxu0 %v139
    %177 = vmatprep.subr.mxu0 0.0
    %178 = vmatpush1.xpose.msra.mxu0 %v136
    %179 = vmatprep.subr.mxu0 0.0
    %180 = vmatpush2.xpose.msra.mxu0 0.0
    %181 = vmatprep.subr.mxu0 0.0
    %182 = vmatpush2.xpose.msra.mxu0 0.0
    %183 = vmatprep.subr.mxu0 0.0
    %184 = vmatpush2.xpose.msra.mxu0 0.0
    %185 = vmatprep.subr.mxu0 0.0
    %186 = vmatpush2.xpose.msra.mxu0 0.0
    %187 = vmatprep.subr.mxu0 0.0
    %188 = vmatpush2.xpose.msra.mxu0 0.0
    %189 = vmatprep.subr.mxu0 0.0
    %190 = vmatpush2.xpose.msra.mxu0 0.0
    %191 = vmatprep.subr.mxu0 0.0
    %192 = vmatpush2.xpose.msra.mxu0 0.0
    %193 = vmatprep.subr.mxu0 0.0
    %194 = vmatpush2.xpose.msra.mxu0 0.0
    %195 = vmatprep.subr.mxu0 0.0
    %196 = vmatpush2.xpose.msra.mxu0 0.0
    %197 = vmatprep.subr.mxu0 0.0
    %198 = vmatpush2.xpose.msra.mxu0 0.0
    %199 = vmatprep.subr.mxu0 0.0
    %200 = vmatpush2.xpose.msra.mxu0 0.0
    %201 = vmatprep.subr.mxu0 0.0
    %202 = vmatpush2.xpose.msra.mxu0 0.0
    %203 = vmatprep.subr.mxu0 0.0
    %204 = vmatpush2.xpose.msra.mxu0 0.0
    %205 = vmatprep.subr.mxu0 0.0
    %206 = vmatpush2.xpose.msra.mxu0 0.0
    %207 = vmatprep.subr.mxu0 0.0
    %208 = vmatpush2.xpose.msra.mxu0 0.0
    %209 = vmatprep.subr.mxu0 0.0
    %210 = vmatpush2.xpose.msra.mxu0 0.0
    %211 = vmatprep.mubr.f32.mxu0 0.0
    %212 = vmatmul.mubr.f32.gmra.mxu0 %v133
    %v213 = vpop.f32.mrf.mxu0
    %v214 = vadd.f32 0.0, %v213
    %v215 = vpop.f32.mrf.mxu0
    %216 = vdwg.mxu0
    %vm217 = vcmask 253952
    %218 = vst.msk [vmem:[#allocation2] sm:$0x1] %vm217, %v214
    // Predicated region
    $region18: #{tpu_custom_call.1} parent=1 // pred_check
      _
    $region19: #{tpu_custom_call.1} parent=1 // pred_check_branch
      %220 = sbr.rel (0) target = $region21
    $region20: #{tpu_custom_call.1} parent=1 // pred_region
      %s222 = ssub.s32 16, 16
      %223 = vsyncadd [#allocation3], %s222
      %s225 = sshll.u32 [#allocation2], 4
      %s226 = int_to_ptr.vmem [resolvable:$true] %s225
      %228 = dma.vmem_to_hbm [thread:$0]  %s226, 16, %s4, [#allocation3]
    $region21: #{tpu_custom_call.1} parent=1 // pred_fallthru
      _
    // Predicated region
    $region22: #{tpu_custom_call.1} parent=1 // pred_check
      _
    $region23: #{tpu_custom_call.1} parent=1 // pred_check_branch
      %230 = sbr.rel (0) target = $region25
    $region24: #{tpu_custom_call.1} parent=1 // pred_region
      %231 = dma.done [#allocation3], 16
    $region25: #{tpu_custom_call.1} parent=1 // pred_fallthru
      _
    %232 = vsyncpa [#allocation3], 1

</llo_original>
